<compile_context>
chip_gen: v6e
topology: v6e:2x2x1
jax: 0.10.0
libtpu: 0.0.40
codegen_flags: <defaults>
</compile_context>

<pallas_src>
import math

import jax
import jax.numpy as jnp
from jax.experimental import pallas as pl
from jax.experimental.pallas import tpu as pltpu


def _round_up(n: int, m: int) -> int:
    return ((n + m - 1) // m) * m


_STREAM_BLOCK_BYTES = None


def _pick_stream_block_bytes() -> int:
    """Target streaming-tile size (f32-equivalent bytes).

    2 MiB by default (in+out double-buffered = 8 MiB, fits v5e's 16 MiB scoped
    VMEM default).  On v7x (64 MiB VMEM/TC, ~3x v6e HBM BW, 32 MiB scoped
    default) use 4 MiB so the ~0.35 us per-grid-step overhead stays amortized.
    """
    global _STREAM_BLOCK_BYTES
    if _STREAM_BLOCK_BYTES is None:
        target = 2 << 20
        try:
            info = pltpu.get_tpu_info()
            if info.vmem_capacity_bytes <= (64 << 20):   # v7x-class part
                target = 4 << 20
        except Exception:
            pass
        _STREAM_BLOCK_BYTES = target
    return _STREAM_BLOCK_BYTES


# ---------------------------------------------------------------------------
# 1. Standalone GaussianKernel.forward (elementwise, lane-dense streaming).
# ---------------------------------------------------------------------------

def _gaussian_body(mu: float, sigma: float):
    mu = float(mu)
    a = -0.5 / float(sigma) ** 2          # folded constant: exp(a * (x - mu)^2)

    def kernel(x_ref, o_ref):
        x = x_ref[...].astype(jnp.float32)     # compute exponent in f32
        d = x - mu
        o_ref[...] = jnp.exp(a * d * d).astype(o_ref.dtype)

    return kernel


def gaussian_kernel(x: jax.Array, mu: float = 1.0, sigma: float = 1.0,
                    *, max_lanes: int = 1024, target_block_bytes: int = None) -> jax.Array:
    """Pallas equivalent of GaussianKernel.forward for any input rank."""
    orig_shape = x.shape
    orig_dtype = x.dtype
    n = int(x.size)
    if n == 0:
        return x
    if target_block_bytes is None:
        target_block_bytes = _pick_stream_block_bytes()

    itemsize = x.dtype.itemsize
    pack = max(8, 32 // itemsize)          # native sublane packing: 8 f32 / 16 bf16 / 32 i8

    flat = x.reshape(-1)

    # Lane width: largest multiple of 128 dividing n (=> no pad, no final slice,
    # no extra HBM round trips); padded fallback only for ragged sizes.
    if n % 128 == 0:
        lanes = 128
        for cand in range(256, max_lanes + 1, 128):
            if n % cand == 0:
                lanes = cand
        rows = n // lanes
    else:
        lanes = min(max_lanes, _round_up(n, 128))
        rows = pl.cdiv(n, lanes)

    # Row block: biggest multiple of `pack` keeping the f32 tile <= target, chosen
    # to minimize padded rows (avoids the old near-2x worst-case padding).
    rb_cap = max(pack, (target_block_bytes // (lanes * 4)) // pack * pack)
    if rows <= rb_cap:
        row_block = _round_up(rows, pack)
    else:
        best_rb, best_waste = pack, None
        cand = rb_cap
        lo = max(pack, rb_cap // 2)
        while cand >= lo:
            waste = _round_up(rows, cand) - rows
            if best_waste is None or waste < best_waste:
                best_rb, best_waste = cand, waste
                if waste == 0:
                    break
            cand -= pack
        row_block = best_rb
    rows_padded = _round_up(rows, row_block)

    # Keep >= 2 grid steps when it costs no extra padding, so the 'parallel'
    # axis actually splits across v7x's two TensorCores.
    if rows_padded // row_block == 1 and row_block >= 2 * pack:
        half = _round_up(row_block // 2, pack)
        if _round_up(rows, half) <= rows_padded:
            row_block = half
            rows_padded = _round_up(rows, half)

    padded_total = rows_padded * lanes
    if padded_total != n:
        flat = jnp.pad(flat, (0, padded_total - n))
    x2 = flat.reshape(rows_padded, lanes)

    out2 = pl.pallas_call(
        _gaussian_body(mu, sigma),
        out_shape=jax.ShapeDtypeStruct((rows_padded, lanes), orig_dtype),
        grid_spec=pltpu.PrefetchScalarGridSpec(
            num_scalar_prefetch=0,
            grid=(rows_padded // row_block,),
            in_specs=[pl.BlockSpec((row_block, lanes), lambda r: (r, 0))],
            out_specs=pl.BlockSpec((row_block, lanes), lambda r: (r, 0)),
        ),
        compiler_params=pltpu.CompilerParams(
            dimension_semantics=("parallel",),
        ),
    )(x2)

    if padded_total != n:
        return out2.reshape(-1)[:n].reshape(orig_shape)
    return out2.reshape(orig_shape)


def gaussian_kernel_ref(x, mu=1.0, sigma=1.0):
    return jnp.exp(-0.5 * (x - mu) ** 2 / sigma ** 2)


# ---------------------------------------------------------------------------
# 2. Fused KNRM kernel pooling: all K Gaussian kernels + log1p/sum reduction.
# ---------------------------------------------------------------------------

def knrm_kernel_params(kernel_num: int = 21, sigma: float = 0.1,
                       exact_sigma: float = 0.001):
    """Mirror of KNRM._get_kernels_layers (mu/sigma per Gaussian kernel)."""
    mus, sigmas = [], []
    for i in range(kernel_num):
        mu = 1.0 / (kernel_num - 1) + 2.0 * i / (kernel_num - 1) - 1.0
        s = sigma
        if mu > 1.0:
            s = exact_sigma
            mu = 1.0
        mus.append(mu)
        sigmas.append(s)
    return tuple(mus), tuple(sigmas)


def _knrm_pool_body(mus, sigmas, num_k: int, k_pad: int):
    """Fused KNRM._apply_kernels body (shared-sigma hoist, Ld accumulation).

    exp(a*(x-mu)^2) = exp(a*mu^2) * exp(a*x^2 + mu*(-2a*x)):
    u = a*x*x and w = -2a*x are computed once per block per unique sigma; each
    kernel then costs 2 big VALU ops + 1 exp, and the exp(a*mu^2) constant is
    applied to the tiny per-query doc sum.  Kernels whose exp(a*mu^2) would
    underflow f32 (the exact-match kernel, sigma=0.001) use the direct form.
    """
    # TODO(synk): the ratio-recurrence trick (21 exps -> ~3 per element) is not
    # adopted due to its f32 underflow hazard when |x - anchor| approaches 2.
    mus = tuple(float(m) for m in mus)
    coeffs = tuple(-0.5 / float(s) ** 2 for s in sigmas)

    def kernel(x_ref, o_ref, ds_ref):
        l = pl.program_id(1)

        @pl.when(l == 0)
        def _():
            ds_ref[...] = jnp.zeros_like(ds_ref)

        x = x_ref[...].astype(jnp.float32)              # (Bt, Lq, Ldt)

        cache = {}                                      # coeff -> (u, w) hoisted per sigma
        ds_parts = []
        for mu_k, a_k in zip(mus, coeffs):
            c_k = a_k * mu_k * mu_k
            if c_k > -60.0:                             # factored form is f32-safe
                if a_k not in cache:
                    cache[a_k] = (a_k * x * x, (-2.0 * a_k) * x)
                u, w = cache[a_k]
                e = jnp.exp(u + mu_k * w)                                 # EUP
                ds = math.exp(c_k) * jnp.sum(e, axis=-1, keepdims=True)   # (Bt, Lq, 1)
            else:                                       # exact-match kernel, direct
                d = x - mu_k
                e = jnp.exp(a_k * (d * d))
                ds = jnp.sum(e, axis=-1, keepdims=True)
            ds_parts.append(ds)
        # One stacked accumulate instead of K masked where-scatters.
        ds_ref[...] += jnp.concatenate(ds_parts, axis=-1)                 # (Bt, Lq, K)

        @pl.when(l == pl.num_programs(1) - 1)
        def _():
            pooled = jnp.sum(jnp.log1p(ds_ref[...]), axis=1, keepdims=True)  # (Bt,1,K)
            if k_pad > num_k:
                pooled = jnp.concatenate(
                    [pooled,
                     jnp.zeros((pooled.shape[0], 1, k_pad - num_k), pooled.dtype)],
                    axis=-1)                                              # lane-dense store
            o_ref[...] = pooled.astype(o_ref.dtype)

    return kernel


def knrm_apply_kernels(matching_matrix: jax.Array, mus, sigmas,
                       *, target_block_bytes: int = 1 << 20) -> jax.Array:
    """Fused KNRM._apply_kernels: (B, Lq, Ld) -> (B, K) float32."""
    assert matching_matrix.ndim == 3, "matching matrix must be (B, Lq, Ld)"
    b, lq, ld = matching_matrix.shape
    num_k = len(mus)
    assert len(sigmas) == num_k
    k_pad = _round_up(num_k, 128)

    # Ld tiling: cap the resident f32 tile (VMEM guard for v7x's 64 MiB and
    # DMA/compute pipelining along Ld).  Only tile when a multiple-of-128
    # divisor of Ld exists — padded doc positions would corrupt the doc sum.
    ld_t = ld
    if lq * ld * 4 > target_block_bytes and ld % 128 == 0:
        cap = max(128, (target_block_bytes // (lq * 4)) // 128 * 128)
        best = 128
        for cand in range(128, min(cap, ld) + 1, 128):
            if ld % cand == 0:
                best = cand
        ld_t = best
    n_ld = ld // ld_t

    # Batch tiling: amortize the ~0.35 us/step overhead over Bt rows, but keep
    # >= 2 grid steps on the 'parallel' axis so both v7x TensorCores get work.
    cap_bt = max(1, target_block_bytes // (lq * ld_t * 4))
    bt = min(b, cap_bt)
    if bt >= b:
        bt = (b + 1) // 2 if b > 1 else 1
    else:
        for cand in range(bt, max(1, bt // 2) - 1, -1):   # prefer bt | b (no padding)
            if b % cand == 0:
                bt = cand
                break
    b_pad = _round_up(b, bt)
    mm = matching_matrix
    if b_pad != b:
        mm = jnp.pad(mm, ((0, b_pad - b), (0, 0), (0, 0)))

    out3 = pl.pallas_call(
        _knrm_pool_body(tuple(mus), tuple(sigmas), num_k, k_pad),
        # Pooled sums stay in f32: the output is tiny and this avoids the
        # bf16 precision loss flagged in review.
        out_shape=jax.ShapeDtypeStruct((b_pad, 1, k_pad), jnp.float32),
        grid_spec=pltpu.PrefetchScalarGridSpec(
            num_scalar_prefetch=0,
            grid=(b_pad // bt, n_ld),
            in_specs=[pl.BlockSpec((bt, lq, ld_t), lambda i, l: (i, 0, l))],
            out_specs=pl.BlockSpec((bt, 1, k_pad), lambda i, l: (i, 0, 0)),
            scratch_shapes=[pltpu.VMEM((bt, lq, num_k), jnp.float32)],
        ),
        compiler_params=pltpu.CompilerParams(
            dimension_semantics=("parallel", "arbitrary"),
        ),
    )(mm)
    return out3[:b, 0, :num_k]


def knrm_apply_kernels_ref(matching_matrix, mus, sigmas):
    km = []
    for mu, s in zip(mus, sigmas):
        g = jnp.exp(-0.5 * (matching_matrix - mu) ** 2 / s ** 2)
        km.append(jnp.sum(jnp.log1p(jnp.sum(g, axis=-1)), axis=-1))
    return jnp.stack(km, axis=1)


if __name__ == "__main__":
    key = jax.random.PRNGKey(0)
    B, Lq, Ld = 2, 8, 16

    # Cosine-similarity style matching matrix in [-1, 1].
    mm = jnp.tanh(jax.random.normal(key, (B, Lq, Ld), dtype=jnp.float32))

    # --- standalone GaussianKernel.forward (small ragged input -> padded path) ---
    mu0, sigma0 = 0.5, 0.1
    y = gaussian_kernel(mm, mu=mu0, sigma=sigma0)
    jax.block_until_ready(y)
    assert y.shape == mm.shape and y.dtype == mm.dtype
    assert jnp.allclose(y, gaussian_kernel_ref(mm, mu0, sigma0),
                        atol=1e-6, rtol=1e-6), "gaussian kernel mismatch"

    # --- aligned input: exercises the no-pad / no-slice fast path, >=2 grid steps ---
    xa = jax.random.normal(jax.random.PRNGKey(1), (16, 1024), dtype=jnp.float32)
    ya = gaussian_kernel(xa, mu=0.0, sigma=1.0)
    jax.block_until_ready(ya)
    assert ya.shape == xa.shape and ya.dtype == xa.dtype
    assert jnp.allclose(ya, gaussian_kernel_ref(xa, 0.0, 1.0),
                        atol=1e-6, rtol=1e-6), "gaussian kernel (aligned) mismatch"

    # --- fused KNRM kernel pooling (21 kernels + log1p/sum reduction) ---
    mus, sigmas = knrm_kernel_params(kernel_num=21, sigma=0.1, exact_sigma=0.001)
    ko = knrm_apply_kernels(mm, mus, sigmas)
    jax.block_until_ready(ko)
    ko_ref = knrm_apply_kernels_ref(mm, mus, sigmas)
    assert ko.shape == (B, len(mus)) and ko.dtype == jnp.float32
    # Tolerance: the shared-sigma factored exponent reorders f32 roundings
    # (~1e-5-level relative differences vs. the direct formula).
    assert jnp.allclose(ko, ko_ref, atol=1e-4, rtol=1e-4), "kernel pooling mismatch"

    print("KERNEL_OK")
</pallas_src>

<mosaic_0001>
module attributes {stable_mosaic.version = 11 : i64} {
  func.func @kernel(%arg0: i32, %arg1: memref<8x256xf32, #tpu.memory_space<vmem>>, %arg2: memref<8x256xf32, #tpu.memory_space<vmem>>) attributes {dimension_semantics = [#tpu.dimension_semantics<parallel>], iteration_bounds = array<i64: 1>, scalar_prefetch = 0 : i64, scratch_operands = 0 : i64, tpu.core_type = #tpu.core_type<tc>, window_params = [{transform_indices = @transform_0, window_bounds = array<i64: 8, 256>}, {transform_indices = @transform_1, window_bounds = array<i64: 8, 256>}]} {
    %c0 = arith.constant 0 : index
    %c0_0 = arith.constant 0 : index
    %0 = vector.load %arg1[%c0, %c0_0] : memref<8x256xf32, #tpu.memory_space<vmem>>, vector<8x256xf32>
    %cst = arith.constant 5.000000e-01 : f32
    %1 = vector.broadcast %cst : f32 to vector<8x256xf32>
    %2 = arith.subf %0, %1 : vector<8x256xf32>
    %cst_1 = arith.constant -5.000000e+01 : f32
    %3 = vector.broadcast %cst_1 : f32 to vector<8x256xf32>
    %4 = arith.mulf %3, %2 : vector<8x256xf32>
    %5 = arith.mulf %4, %2 : vector<8x256xf32>
    %6 = math.exp %5 : vector<8x256xf32>
    %c0_2 = arith.constant 0 : index
    %c0_3 = arith.constant 0 : index
    %7 = vector.load %arg2[%c0_2, %c0_3] : memref<8x256xf32, #tpu.memory_space<vmem>>, vector<8x256xf32>
    tpu.vector_store %arg2[%c0_2, %c0_3], %6 {strides = array<i32>} : memref<8x256xf32, #tpu.memory_space<vmem>>, vector<8x256xf32>,
    return
  }
  func.func @transform_0(%arg0: i32) -> (i32, i32) {
    %c0_i32 = arith.constant 0 : i32
    %c0_i32_0 = arith.constant 0 : i32
    return %arg0, %c0_i32 : i32, i32
  }
  func.func @transform_1(%arg0: i32) -> (i32, i32) {
    %c0_i32 = arith.constant 0 : i32
    %c0_i32_0 = arith.constant 0 : i32
    return %arg0, %c0_i32 : i32, i32
  }
}

</mosaic_0001>

<llo_original>
// kernel: tpu_custom_call.1
$region0: #{tpu_custom_call.1}
  #allocation0 [shape = 'u32[]', space=smem, size = 0x4, offset = 0x4, fixed_abs, tag = 'smem constant byte address 0x4 - core index']
  #allocation1 [shape = 'u32[144,128]{1,0:T(1,128)}', space=vmem, size = 0x12000, scoped, tag = 'internal scratch']
  %s0 = inlined_call_operand.hbm [shape: f32[8,256], index: 0, kind: input, shape index: {}]
  %s1 = inlined_call_operand.hbm [shape: f32[8,256], index: 1, kind: output, shape index: {}]
  %s2 = sld [smem:[#allocation0]]
  $region18: #{tpu_custom_call.1} parent=0
    _
  %s4 = ssub.s32 1, %s2
  %s5 = scalar_select 0, %s4, %s2
  $region1: #{tpu_custom_call.1} parent=0
    #allocation2 [shape = 'u8[8192]{0}', space=vmem, size = 0x2000, scoped, tag = 'input window, operand 0, single buffered']
    #allocation3 [shape = 's32[1]{0}', space=sflag, size = 0x4, scoped, tag = 'scoped memory for tpu_custom_call.1']
    #allocation4 [shape = 's32[1]{0}', space=sflag, size = 0x4, scoped, tag = 'scoped memory for tpu_custom_call.1']
    #allocation5 [shape = 'u8[8192]{0}', space=vmem, size = 0x2000, scoped, tag = 'output window, operand 0, single buffered']
    %6 = vsyncpa [#allocation3], 0
    %7 = vsyncpa [#allocation4], 0
    // Predicated region
    $region2: #{tpu_custom_call.1} parent=1 // pred_check
      _
    $region3: #{tpu_custom_call.1} parent=1 // pred_check_branch
      %9 = sbr.rel (0) target = $region5
    $region4: #{tpu_custom_call.1} parent=1 // pred_region
      %s11 = ssub.s32 256, 256
      %12 = vsyncadd [#allocation3], %s11
      %s14 = sshll.u32 [#allocation2], 4
      %s15 = int_to_ptr.vmem [resolvable:$true] %s14
      %17 = dma.hbm_to_vmem [thread:$0]  %s0, 256, %s15, [#allocation3]
    $region5: #{tpu_custom_call.1} parent=1 // pred_fallthru
      _
    // Predicated region
    $region6: #{tpu_custom_call.1} parent=1 // pred_check
      _
    $region7: #{tpu_custom_call.1} parent=1 // pred_check_branch
      %19 = sbr.rel (0) target = $region9
    $region8: #{tpu_custom_call.1} parent=1 // pred_region
      %20 = dma.done [#allocation3], 256
    $region9: #{tpu_custom_call.1} parent=1 // pred_fallthru
      _
    %v21 = vld [vmem:[#allocation2] sm:$0xff]
    %v22 = vld [vmem:[#allocation2 + $0x8] sm:$0xff]
    %v23 = vsub.f32 %v21, 0.5
    %v24 = vsub.f32 %v22, 0.5
    %v25 = vmul.f32 %v23, -50.0
    %v26 = vmul.f32 %v24, -50.0
    %v27 = vmul.f32 %v25, %v23
    %v28 = vmul.f32 %v26, %v24
    %v29 = vmul.f32 %v27, 1.442695
    %v30 = vpow.pop %v29
    %v31 = vmul.f32 %v28, 1.442695
    %v32 = vpow.pop %v31
    %33 = vst [vmem:[#allocation5] sm:$0xff] %v30
    %34 = vst [vmem:[#allocation5 + $0x8] sm:$0xff] %v32
    // Predicated region
    $region10: #{tpu_custom_call.1} parent=1 // pred_check
      _
    $region11: #{tpu_custom_call.1} parent=1 // pred_check_branch
      %36 = sbr.rel (0) target = $region13
    $region12: #{tpu_custom_call.1} parent=1 // pred_region
      %s38 = ssub.s32 256, 256
      %39 = vsyncadd [#allocation4], %s38
      %s41 = sshll.u32 [#allocation5], 4
      %s42 = int_to_ptr.vmem [resolvable:$true] %s41
      %44 = dma.vmem_to_hbm [thread:$0]  %s42, 256, %s1, [#allocation4]
    $region13: #{tpu_custom_call.1} parent=1 // pred_fallthru
      _
    // Predicated region
    $region14: #{tpu_custom_call.1} parent=1 // pred_check
      _
    $region15: #{tpu_custom_call.1} parent=1 // pred_check_branch
      %46 = sbr.rel (0) target = $region17
    $region16: #{tpu_custom_call.1} parent=1 // pred_region
      %47 = dma.done [#allocation4], 256
    $region17: #{tpu_custom_call.1} parent=1 // pred_fallthru
      _
    %48 = vsyncpa [#allocation3], 1
    %49 = vsyncpa [#allocation4], 1

</llo_original>
